<compile_context>
chip_gen: v6e
topology: v6e:2x2x1
jax: 0.10.0
libtpu: 0.0.40
codegen_flags: <defaults>
</compile_context>

<pallas_src>
import jax
import jax.numpy as jnp
from jax.experimental import pallas as pl
from jax.experimental.pallas import tpu as pltpu

# Model config (matches the FCNet defaults used here).
INPUT_SIZE = 32
FC_LAYER_DIMS = (64, 64)
OUTPUT_DIM = 16

# Lane-packing factor: 4 batch rows per packed row turns the feature dims
# (32 / 64 / 16) into 128 / 256 / 64.  Input and hidden activations are fully
# lane-dense; only the 64-wide output store is masked.  PACK=4 (vs 8) halves
# the block-diagonal MXU work, which keeps v5e/v7x memory-bound.
PACK = 4

# Max packed rows per grid step (=> up to PACK * 4096 = 16384 batch rows/tile,
# ~1 MiB of x + 2 MiB x/out double-buffers + ~14 MiB intermediates per step).
MAX_BLOCK_ROWS = 4096

# Explicit scoped-VMEM budget for the enlarged tile (fits v5e/v6e 128 MiB and
# v7x 64 MiB physical VMEM with headroom).
VMEM_LIMIT_BYTES = 48 * 1024 * 1024


def _round_up(a, m):
    return ((a + m - 1) // m) * m


def _fcnet_kernel(x_ref, w1_ref, b1_ref, w2_ref, b2_ref, w3_ref, b3_ref, o_ref):
    # Matmul operands in bf16 (native MXU path), accumulate in f32;
    # bias-add + ReLU in f32 so the VPU work stays on the f32 path (v5e-safe).
    h = jnp.dot(x_ref[...].astype(jnp.bfloat16), w1_ref[...],
                preferred_element_type=jnp.float32)
    h = jnp.maximum(h + b1_ref[...], 0.0)
    h = jnp.dot(h.astype(jnp.bfloat16), w2_ref[...],
                preferred_element_type=jnp.float32)
    h = jnp.maximum(h + b2_ref[...], 0.0)
    h = jnp.dot(h.astype(jnp.bfloat16), w3_ref[...],
                preferred_element_type=jnp.float32)
    o_ref[...] = jnp.maximum(h + b3_ref[...], 0.0).astype(o_ref.dtype)


def prepare_packed_params(params, pack=PACK):
    """Block-diagonalize weights (kron with I_pack) and tile biases.

    With x reshaped [B, d_in] -> [B/pack, pack*d_in] (pure row-major reshape),
    x_packed @ block_diag(W, ..., W) computes `pack` independent batch rows
    per lane-dense packed row.  Weights are cast to bf16 once (they stay
    resident in VMEM); biases stay f32.  Do this once per model, not per call.
    """
    eye = jnp.eye(pack, dtype=jnp.float32)
    packed = []
    for w, b in params:
        w_bd = jnp.kron(eye, w).astype(jnp.bfloat16)       # [pack*in, pack*out]
        b_bd = jnp.tile(b, (1, pack)).astype(jnp.float32)  # [1, pack*out]
        packed.append((w_bd, b_bd))
    return packed


def fcnet_forward(x, packed_params, pack=PACK, max_block_rows=MAX_BLOCK_ROWS):
    """x: [B, input_size] float32. packed_params from prepare_packed_params."""
    (w1, b1), (w2, b2), (w3, b3) = packed_params
    batch, in_dim = x.shape
    out_dim = w3.shape[1] // pack

    # Packed-row geometry: one packed row = `pack` batch rows.
    n_rows = pl.cdiv(batch, pack)
    # Tile rows: multiple of 16 (bf16 sublane packing), capped by
    # max_block_rows (budget derived against the 48 MiB VMEM limit below).
    block_rows = min(max_block_rows, _round_up(n_rows, 16))
    # Keep at least 2 grid steps when there is enough work: gives v7x's two
    # TensorCores something each and preserves x/out DMA pipelining.
    if n_rows > 16 and pl.cdiv(n_rows, block_rows) < 2:
        block_rows = _round_up(pl.cdiv(n_rows, 2), 16)
    n_rows_pad = _round_up(n_rows, block_rows)
    batch_pad = n_rows_pad * pack
    if batch_pad != batch:
        x = jnp.pad(x, ((0, batch_pad - batch), (0, 0)))
    x_packed = x.reshape(n_rows_pad, pack * in_dim)  # lane-dense input rows

    grid = (n_rows_pad // block_rows,)

    def resident(arr):  # weights/biases: same block every grid step
        return pl.BlockSpec(arr.shape, lambda i: (0, 0))

    # Reports the (pack-inflated) block-diag FLOPs, which is what the MXU
    # actually executes; stays in sync automatically if PACK changes.
    flops = 2 * n_rows_pad * (w1.shape[0] * w1.shape[1]
                              + w2.shape[0] * w2.shape[1]
                              + w3.shape[0] * w3.shape[1])
    bytes_accessed = (x_packed.nbytes
                      + n_rows_pad * pack * out_dim * 4
                      + sum(a.nbytes for p in packed_params for a in p))

    y_packed = pl.pallas_call(
        _fcnet_kernel,
        out_shape=jax.ShapeDtypeStruct((n_rows_pad, pack * out_dim),
                                       jnp.float32),
        grid=grid,
        in_specs=[
            pl.BlockSpec((block_rows, pack * in_dim), lambda i: (i, 0)),
            resident(w1), resident(b1),
            resident(w2), resident(b2),
            resident(w3), resident(b3),
        ],
        out_specs=pl.BlockSpec((block_rows, pack * out_dim), lambda i: (i, 0)),
        compiler_params=pltpu.CompilerParams(
            dimension_semantics=("parallel",),
            vmem_limit_bytes=VMEM_LIMIT_BYTES),
        cost_estimate=pl.CostEstimate(flops=flops, transcendentals=0,
                                      bytes_accessed=bytes_accessed),
    )(x_packed, w1, b1, w2, b2, w3, b3)

    return y_packed.reshape(batch_pad, out_dim)[:batch]


def init_fcnet_params(key, input_size, fc_layer_dims, output_dim):
    """Deterministic init. Weights stored as [in, out]; biases as [1, out]."""
    dims = [input_size] + list(fc_layer_dims) + [output_dim]
    params = []
    for d_in, d_out in zip(dims[:-1], dims[1:]):
        key, kw, kb = jax.random.split(key, 3)
        bound = 1.0 / jnp.sqrt(jnp.float32(d_in))
        w = jax.random.uniform(kw, (d_in, d_out), jnp.float32, -bound, bound)
        b = jax.random.uniform(kb, (1, d_out), jnp.float32, -bound, bound)
        params.append((w, b))
    return params


def fcnet_reference(x, params):
    """Plain f32 JAX reference of the same forward pass."""
    h = x
    for w, b in params:
        h = jnp.maximum(h @ w + b, 0.0)
    return h


def fcnet_reference_bf16(x, params):
    """Reference that matches the kernel's bf16-operand / f32-accum matmuls."""
    h = x
    for w, b in params:
        d = jnp.dot(h.astype(jnp.bfloat16), w.astype(jnp.bfloat16),
                    preferred_element_type=jnp.float32)
        h = jnp.maximum(d + b, 0.0)
    return h


if __name__ == "__main__":
    batch = 96  # small demo batch; exercises the pad + multi-step-grid paths

    key = jax.random.PRNGKey(0)
    key, kx = jax.random.split(key)
    x = jax.random.normal(kx, (batch, INPUT_SIZE), jnp.float32)
    params = init_fcnet_params(key, INPUT_SIZE, list(FC_LAYER_DIMS), OUTPUT_DIM)
    packed_params = prepare_packed_params(params)

    out = jax.block_until_ready(fcnet_forward(x, packed_params))

    ref_bf16 = fcnet_reference_bf16(x, params)
    ref_f32 = fcnet_reference(x, params)
    assert out.shape == (batch, OUTPUT_DIM)
    assert jnp.allclose(out, ref_bf16, atol=2e-3, rtol=2e-3), (
        "max abs diff vs bf16 ref: %f" % float(jnp.max(jnp.abs(out - ref_bf16))))
    assert jnp.allclose(out, ref_f32, atol=5e-2, rtol=5e-2), (
        "max abs diff vs f32 ref: %f" % float(jnp.max(jnp.abs(out - ref_f32))))

    print("KERNEL_OK")
</pallas_src>

<mosaic_0001>
module attributes {stable_mosaic.version = 11 : i64} {
  func.func @_fcnet_kernel(%arg0: i32, %arg1: memref<16x128xf32, #tpu.memory_space<vmem>>, %arg2: memref<128x256xbf16, #tpu.memory_space<vmem>>, %arg3: memref<1x256xf32, #tpu.memory_space<vmem>>, %arg4: memref<256x256xbf16, #tpu.memory_space<vmem>>, %arg5: memref<1x256xf32, #tpu.memory_space<vmem>>, %arg6: memref<256x64xbf16, #tpu.memory_space<vmem>>, %arg7: memref<1x64xf32, #tpu.memory_space<vmem>>, %arg8: memref<16x64xf32, #tpu.memory_space<vmem>>) attributes {dimension_semantics = [#tpu.dimension_semantics<parallel>], iteration_bounds = array<i64: 2>, scalar_prefetch = 0 : i64, scratch_operands = 0 : i64, tpu.core_type = #tpu.core_type<tc>, window_params = [{transform_indices = @transform_0, window_bounds = array<i64: 16, 128>}, {pipeline_mode = #tpu.pipeline_mode<synchronous>, transform_indices = @transform_1, window_bounds = array<i64: 128, 256>}, {pipeline_mode = #tpu.pipeline_mode<synchronous>, transform_indices = @transform_2, window_bounds = array<i64: 1, 256>}, {pipeline_mode = #tpu.pipeline_mode<synchronous>, transform_indices = @transform_3, window_bounds = array<i64: 256, 256>}, {pipeline_mode = #tpu.pipeline_mode<synchronous>, transform_indices = @transform_4, window_bounds = array<i64: 1, 256>}, {pipeline_mode = #tpu.pipeline_mode<synchronous>, transform_indices = @transform_5, window_bounds = array<i64: 256, 64>}, {pipeline_mode = #tpu.pipeline_mode<synchronous>, transform_indices = @transform_6, window_bounds = array<i64: 1, 64>}, {transform_indices = @transform_7, window_bounds = array<i64: 16, 64>}]} {
    %c0 = arith.constant 0 : index
    %c0_0 = arith.constant 0 : index
    %0 = vector.load %arg1[%c0, %c0_0] : memref<16x128xf32, #tpu.memory_space<vmem>>, vector<16x128xf32>
    %1 = arith.truncf %0 : vector<16x128xf32> to vector<16x128xbf16>
    %c0_1 = arith.constant 0 : index
    %c0_2 = arith.constant 0 : index
    %2 = vector.load %arg2[%c0_1, %c0_2] : memref<128x256xbf16, #tpu.memory_space<vmem>>, vector<128x256xbf16>
    %cst = arith.constant dense<0.000000e+00> : vector<16x256xf32>
    %3 = tpu.matmul %1, %2, %cst {dimension_numbers = #tpu.dot_dimension_numbers<[1], [0], [0], [1], [0, 0, 1, 1], [], []>} : vector<16x128xbf16>, vector<128x256xbf16>, vector<16x256xf32> -> vector<16x256xf32>
    %c0_3 = arith.constant 0 : index
    %c0_4 = arith.constant 0 : index
    %4 = vector.load %arg3[%c0_3, %c0_4] : memref<1x256xf32, #tpu.memory_space<vmem>>, vector<1x256xf32>
    %5 = vector.broadcast %4 : vector<1x256xf32> to vector<16x256xf32>
    %6 = arith.addf %3, %5 : vector<16x256xf32>
    %cst_5 = arith.constant 0.000000e+00 : f32
    %7 = vector.broadcast %cst_5 : f32 to vector<16x256xf32>
    %8 = arith.maximumf %6, %7 : vector<16x256xf32>
    %9 = arith.truncf %8 : vector<16x256xf32> to vector<16x256xbf16>
    %c0_6 = arith.constant 0 : index
    %c0_7 = arith.constant 0 : index
    %10 = vector.load %arg4[%c0_6, %c0_7] : memref<256x256xbf16, #tpu.memory_space<vmem>>, vector<256x256xbf16>
    %cst_8 = arith.constant dense<0.000000e+00> : vector<16x256xf32>
    %11 = tpu.matmul %9, %10, %cst_8 {dimension_numbers = #tpu.dot_dimension_numbers<[1], [0], [0], [1], [0, 0, 1, 1], [], []>} : vector<16x256xbf16>, vector<256x256xbf16>, vector<16x256xf32> -> vector<16x256xf32>
    %c0_9 = arith.constant 0 : index
    %c0_10 = arith.constant 0 : index
    %12 = vector.load %arg5[%c0_9, %c0_10] : memref<1x256xf32, #tpu.memory_space<vmem>>, vector<1x256xf32>
    %13 = vector.broadcast %12 : vector<1x256xf32> to vector<16x256xf32>
    %14 = arith.addf %11, %13 : vector<16x256xf32>
    %cst_11 = arith.constant 0.000000e+00 : f32
    %15 = vector.broadcast %cst_11 : f32 to vector<16x256xf32>
    %16 = arith.maximumf %14, %15 : vector<16x256xf32>
    %17 = arith.truncf %16 : vector<16x256xf32> to vector<16x256xbf16>
    %c0_12 = arith.constant 0 : index
    %c0_13 = arith.constant 0 : index
    %18 = vector.load %arg6[%c0_12, %c0_13] : memref<256x64xbf16, #tpu.memory_space<vmem>>, vector<256x64xbf16>
    %cst_14 = arith.constant dense<0.000000e+00> : vector<16x64xf32>
    %19 = tpu.matmul %17, %18, %cst_14 {dimension_numbers = #tpu.dot_dimension_numbers<[1], [0], [0], [1], [0, 0, 1, 1], [], []>} : vector<16x256xbf16>, vector<256x64xbf16>, vector<16x64xf32> -> vector<16x64xf32>
    %c0_15 = arith.constant 0 : index
    %c0_16 = arith.constant 0 : index
    %20 = vector.load %arg7[%c0_15, %c0_16] : memref<1x64xf32, #tpu.memory_space<vmem>>, vector<1x64xf32>
    %21 = vector.broadcast %20 : vector<1x64xf32> to vector<16x64xf32>
    %22 = arith.addf %19, %21 : vector<16x64xf32>
    %cst_17 = arith.constant 0.000000e+00 : f32
    %23 = vector.broadcast %cst_17 : f32 to vector<16x64xf32>
    %24 = arith.maximumf %22, %23 : vector<16x64xf32>
    %c0_18 = arith.constant 0 : index
    %c0_19 = arith.constant 0 : index
    %25 = vector.load %arg8[%c0_18, %c0_19] : memref<16x64xf32, #tpu.memory_space<vmem>>, vector<16x64xf32>
    tpu.vector_store %arg8[%c0_18, %c0_19], %24 {strides = array<i32>} : memref<16x64xf32, #tpu.memory_space<vmem>>, vector<16x64xf32>,
    return
  }
  func.func @transform_0(%arg0: i32) -> (i32, i32) {
    %c0_i32 = arith.constant 0 : i32
    %c0_i32_0 = arith.constant 0 : i32
    return %arg0, %c0_i32 : i32, i32
  }
  func.func @transform_1(%arg0: i32) -> (i32, i32) {
    %c0_i32 = arith.constant 0 : i32
    %c0_i32_0 = arith.constant 0 : i32
    %c0_i32_1 = arith.constant 0 : i32
    return %c0_i32, %c0_i32_0 : i32, i32
  }
  func.func @transform_2(%arg0: i32) -> (i32, i32) {
    %c0_i32 = arith.constant 0 : i32
    %c0_i32_0 = arith.constant 0 : i32
    %c0_i32_1 = arith.constant 0 : i32
    return %c0_i32, %c0_i32_0 : i32, i32
  }
  func.func @transform_3(%arg0: i32) -> (i32, i32) {
    %c0_i32 = arith.constant 0 : i32
    %c0_i32_0 = arith.constant 0 : i32
    %c0_i32_1 = arith.constant 0 : i32
    return %c0_i32, %c0_i32_0 : i32, i32
  }
  func.func @transform_4(%arg0: i32) -> (i32, i32) {
    %c0_i32 = arith.constant 0 : i32
    %c0_i32_0 = arith.constant 0 : i32
    %c0_i32_1 = arith.constant 0 : i32
    return %c0_i32, %c0_i32_0 : i32, i32
  }
  func.func @transform_5(%arg0: i32) -> (i32, i32) {
    %c0_i32 = arith.constant 0 : i32
    %c0_i32_0 = arith.constant 0 : i32
    %c0_i32_1 = arith.constant 0 : i32
    return %c0_i32, %c0_i32_0 : i32, i32
  }
  func.func @transform_6(%arg0: i32) -> (i32, i32) {
    %c0_i32 = arith.constant 0 : i32
    %c0_i32_0 = arith.constant 0 : i32
    %c0_i32_1 = arith.constant 0 : i32
    return %c0_i32, %c0_i32_0 : i32, i32
  }
  func.func @transform_7(%arg0: i32) -> (i32, i32) {
    %c0_i32 = arith.constant 0 : i32
    %c0_i32_0 = arith.constant 0 : i32
    return %arg0, %c0_i32 : i32, i32
  }
}

</mosaic_0001>

<llo_original>
// kernel: tpu_custom_call.1
$region0: #{tpu_custom_call.1}
  #allocation0 [shape = 'u32[]', space=smem, size = 0x4, offset = 0x4, fixed_abs, tag = 'smem constant byte address 0x4 - core index']
  #allocation1 [shape = 'u32[144,128]{1,0:T(1,128)}', space=vmem, size = 0x12000, scoped, tag = 'internal scratch']
  %s0 = inlined_call_operand.vmem [shape: f32[32,128], index: 0, kind: input, shape index: {}]
  %s1 = inlined_call_operand.vmem [shape: bf16[128,256], index: 1, kind: input, shape index: {}]
  %s2 = inlined_call_operand.vmem [shape: f32[1,256], index: 2, kind: input, shape index: {}]
  %s3 = inlined_call_operand.hbm [shape: bf16[256,256], index: 3, kind: input, shape index: {}]
  %s4 = inlined_call_operand.vmem [shape: f32[1,256], index: 4, kind: input, shape index: {}]
  %s5 = inlined_call_operand.vmem [shape: bf16[256,64], index: 5, kind: input, shape index: {}]
  %s6 = inlined_call_operand.vmem [shape: f32[1,64], index: 6, kind: input, shape index: {}]
  %s7 = inlined_call_operand.hbm [shape: f32[32,64], index: 7, kind: output, shape index: {}]
  %s8 = sld [smem:[#allocation0]]
  $region65: #{tpu_custom_call.1} parent=0
    _
  %s10 = ssub.s32 1, %s8
  %s11 = scalar_select 0, %s10, %s8
  $region1: #{tpu_custom_call.1} parent=0
    #allocation2 [shape = 'u8[131072]{0}', space=vmem, size = 0x20000, scoped, tag = 'input window, operand 3, single buffered']
    #allocation3 [shape = 's32[2]{0}', space=sflag, size = 0x8, scoped, tag = 'scoped memory for tpu_custom_call.1']
    #allocation4 [shape = 's32[2]{0}', space=sflag, size = 0x8, scoped, tag = 'scoped memory for tpu_custom_call.1']
    #allocation5 [shape = 'u8[16384]{0}', space=vmem, size = 0x4000, scoped, tag = 'output window, operand 0']
    %12 = vsyncpa [#allocation3], 0
    %13 = vsyncpa [#allocation4], 0
    %s14 = scalar_lea.sflag [#allocation4], 1
    %15 = vsyncpa %s14, 0
    loop: start=0, step=1, limit=4
    $region2: #{tpu_custom_call.1} parent=1 // loop_pre_header
      _
    $region3: #{tpu_custom_call.1} parent=1 // loop_header
      %s17 = sphi 0, %s21
      %p18 = scmp.ge.s32.totalorder %s17, 4
      %s27 = sphi 0, %s29
      %s30 = sphi 0, %s27
      %s31 = sphi 0, %s30
      %s47 = sphi 0, %s31
      %s51 = sphi 0, %s51
      %s53 = sphi 0, %s51
      %s54 = sphi 0, %s53
      %s68 = sphi 0, %s54
      %s72 = sphi 0, %s72
      %s74 = sphi 0, %s72
      %s75 = sphi 0, %s74
      %s89 = sphi 0, %s75
      %s93 = sphi 0, %s93
      %s95 = sphi 0, %s93
      %s96 = sphi 0, %s95
      %s110 = sphi 0, %s96
      %s114 = sphi 0, %s114
      %s116 = sphi 0, %s114
      %s117 = sphi 0, %s116
      %s131 = sphi 0, %s117
      %s135 = sphi 0, %s135
      %s137 = sphi 0, %s135
      %s138 = sphi 0, %s137
      %s152 = sphi 0, %s138
      %s156 = sphi 0, %s156
      %s158 = sphi 0, %s156
      %s159 = sphi 0, %s158
      %s173 = sphi 0, %s159
      %s179 = sphi 0, %s181
      %s182 = sphi 0, %s179
      %s183 = sphi 0, %s182
      %s199 = sphi 0, %s183
    $region4: #{tpu_custom_call.1} parent=1 // loop_header_branch
      %20 = sbr.rel (%p18) target = $region8
    $region5: #{tpu_custom_call.1} parent=1 // loop_body
      %s22 = ssub.s32 %s17, 1
      %s23 = ssub.s32 %s17, 2
      %s24 = sadd.s32 %s17, 1
      %s25 = ssub.s32 %s17, %s24
      %p26 = scmp.eq.s32.totalorder %s25, 0
      %s28 = sadd.s32 %s27, 1
      %s29 = scalar_select %p26, %s27, %s28
      %p32 = pneg %p26
      %p33 = scmp.eq.s32.totalorder %s17, 1
      %p34 = por %p32, %p33
      %p35 = scmp.ne.s32.totalorder %s27, %s30
      %p36 = scmp.eq.s32.totalorder %s17, 0
      %p37 = por %p35, %p36
      %p38 = scmp.ne.s32.totalorder %s27, %s30
      %p39 = scmp.eq.s32.totalorder %s22, 1
      %p40 = por %p38, %p39
      %p41 = scmp.ne.s32.totalorder %s30, %s31
      %p42 = scmp.eq.s32.totalorder %s22, 0
      %p43 = por %p41, %p42
      %p44 = scmp.ne.s32.totalorder %s30, %s31
      %p45 = scmp.eq.s32.totalorder %s23, 1
      %p46 = por %p44, %p45
      %p48 = scmp.ne.s32.totalorder %s31, %s47
      %p49 = scmp.eq.s32.totalorder %s23, 0
      %p50 = por %p48, %p49
      %s52 = sadd.s32 %s51, 1
      %p55 = scmp.eq.s32.totalorder %s17, 1
      %p56 = scmp.ne.s32.totalorder %s51, %s53
      %p57 = scmp.eq.s32.totalorder %s17, 0
      %p58 = por %p56, %p57
      %p59 = scmp.ne.s32.totalorder %s51, %s53
      %p60 = scmp.eq.s32.totalorder %s22, 1
      %p61 = por %p59, %p60
      %p62 = scmp.ne.s32.totalorder %s53, %s54
      %p63 = scmp.eq.s32.totalorder %s22, 0
      %p64 = por %p62, %p63
      %p65 = scmp.ne.s32.totalorder %s53, %s54
      %p66 = scmp.eq.s32.totalorder %s23, 1
      %p67 = por %p65, %p66
      %p69 = scmp.ne.s32.totalorder %s54, %s68
      %p70 = scmp.eq.s32.totalorder %s23, 0
      %p71 = por %p69, %p70
      %s73 = sadd.s32 %s72, 1
      %p76 = scmp.eq.s32.totalorder %s17, 1
      %p77 = scmp.ne.s32.totalorder %s72, %s74
      %p78 = scmp.eq.s32.totalorder %s17, 0
      %p79 = por %p77, %p78
      %p80 = scmp.ne.s32.totalorder %s72, %s74
      %p81 = scmp.eq.s32.totalorder %s22, 1
      %p82 = por %p80, %p81
      %p83 = scmp.ne.s32.totalorder %s74, %s75
      %p84 = scmp.eq.s32.totalorder %s22, 0
      %p85 = por %p83, %p84
      %p86 = scmp.ne.s32.totalorder %s74, %s75
      %p87 = scmp.eq.s32.totalorder %s23, 1
      %p88 = por %p86, %p87
      %p90 = scmp.ne.s32.totalorder %s75, %s89
      %p91 = scmp.eq.s32.totalorder %s23, 0
      %p92 = por %p90, %p91
      %s94 = sadd.s32 %s93, 1
      %p97 = scmp.eq.s32.totalorder %s17, 1
      %p98 = scmp.ne.s32.totalorder %s93, %s95
      %p99 = scmp.eq.s32.totalorder %s17, 0
      %p100 = por %p98, %p99
      %p101 = scmp.ne.s32.totalorder %s93, %s95
      %p102 = scmp.eq.s32.totalorder %s22, 1
      %p103 = por %p101, %p102
      %p104 = scmp.ne.s32.totalorder %s95, %s96
      %p105 = scmp.eq.s32.totalorder %s22, 0
      %p106 = por %p104, %p105
      %p107 = scmp.ne.s32.totalorder %s95, %s96
      %p108 = scmp.eq.s32.totalorder %s23, 1
      %p109 = por %p107, %p108
      %p111 = scmp.ne.s32.totalorder %s96, %s110
      %p112 = scmp.eq.s32.totalorder %s23, 0
      %p113 = por %p111, %p112
      %s115 = sadd.s32 %s114, 1
      %p118 = scmp.eq.s32.totalorder %s17, 1
      %p119 = scmp.ne.s32.totalorder %s114, %s116
      %p120 = scmp.eq.s32.totalorder %s17, 0
      %p121 = por %p119, %p120
      %p122 = scmp.ne.s32.totalorder %s114, %s116
      %p123 = scmp.eq.s32.totalorder %s22, 1
      %p124 = por %p122, %p123
      %p125 = scmp.ne.s32.totalorder %s116, %s117
      %p126 = scmp.eq.s32.totalorder %s22, 0
      %p127 = por %p125, %p126
      %p128 = scmp.ne.s32.totalorder %s116, %s117
      %p129 = scmp.eq.s32.totalorder %s23, 1
      %p130 = por %p128, %p129
      %p132 = scmp.ne.s32.totalorder %s117, %s131
      %p133 = scmp.eq.s32.totalorder %s23, 0
      %p134 = por %p132, %p133
      %s136 = sadd.s32 %s135, 1
      %p139 = scmp.eq.s32.totalorder %s17, 1
      %p140 = scmp.ne.s32.totalorder %s135, %s137
      %p141 = scmp.eq.s32.totalorder %s17, 0
      %p142 = por %p140, %p141
      %p143 = scmp.ne.s32.totalorder %s135, %s137
      %p144 = scmp.eq.s32.totalorder %s22, 1
      %p145 = por %p143, %p144
      %p146 = scmp.ne.s32.totalorder %s137, %s138
      %p147 = scmp.eq.s32.totalorder %s22, 0
      %p148 = por %p146, %p147
      %p149 = scmp.ne.s32.totalorder %s137, %s138
      %p150 = scmp.eq.s32.totalorder %s23, 1
      %p151 = por %p149, %p150
      %p153 = scmp.ne.s32.totalorder %s138, %s152
      %p154 = scmp.eq.s32.totalorder %s23, 0
      %p155 = por %p153, %p154
      %s157 = sadd.s32 %s156, 1
      %p160 = scmp.eq.s32.totalorder %s17, 1
      %p161 = scmp.ne.s32.totalorder %s156, %s158
      %p162 = scmp.eq.s32.totalorder %s17, 0
      %p163 = por %p161, %p162
      %p164 = scmp.ne.s32.totalorder %s156, %s158
      %p165 = scmp.eq.s32.totalorder %s22, 1
      %p166 = por %p164, %p165
      %p167 = scmp.ne.s32.totalorder %s158, %s159
      %p168 = scmp.eq.s32.totalorder %s22, 0
      %p169 = por %p167, %p168
      %p170 = scmp.ne.s32.totalorder %s158, %s159
      %p171 = scmp.eq.s32.totalorder %s23, 1
      %p172 = por %p170, %p171
      %p174 = scmp.ne.s32.totalorder %s159, %s173
      %p175 = scmp.eq.s32.totalorder %s23, 0
      %p176 = por %p174, %p175
      %s177 = ssub.s32 %s17, %s24
      %p178 = scmp.eq.s32.totalorder %s177, 0
      %s180 = sadd.s32 %s179, 1
      %s181 = scalar_select %p178, %s179, %s180
      %p184 = pneg %p178
      %p185 = scmp.eq.s32.totalorder %s17, 1
      %p186 = por %p184, %p185
      %p187 = scmp.ne.s32.totalorder %s179, %s182
      %p188 = scmp.eq.s32.totalorder %s17, 0
      %p189 = por %p187, %p188
      %p190 = scmp.ne.s32.totalorder %s179, %s182
      %p191 = scmp.eq.s32.totalorder %s22, 1
      %p192 = por %p190, %p191
      %p193 = scmp.ne.s32.totalorder %s182, %s183
      %p194 = scmp.eq.s32.totalorder %s22, 0
      %p195 = por %p193, %p194
      %p196 = scmp.ne.s32.totalorder %s182, %s183
      %p197 = scmp.eq.s32.totalorder %s23, 1
      %p198 = por %p196, %p197
      %p200 = scmp.ne.s32.totalorder %s183, %s199
      %p201 = scmp.eq.s32.totalorder %s23, 0
      %p202 = por %p200, %p201
      %p203 = scmp.le.s32.totalorder 1, %s17
      %p204 = scmp.lt.s32.totalorder %s17, 3
      %p205 = pnand %p203, %p204
      %p206 = pneg %p205
      // Predicated region
      $region9: #{tpu_custom_call.1} parent=5 // pred_check
        _
      $region10: #{tpu_custom_call.1} parent=5 // pred_check_branch
        %208 = sbr.rel (%p205) target = $region12
      $region11: #{tpu_custom_call.1} parent=5 // pred_region
        %s209 = ssub.s32 %s17, 1
        // Predicated region
        $region13: #{tpu_custom_call.1} parent=11 // pred_check
          %p210 = pneg %p64
        $region14: #{tpu_custom_call.1} parent=11 // pred_check_branch
          %212 = sbr.rel (%p210) target = $region16
        $region15: #{tpu_custom_call.1} parent=11 // pred_region
          _
        $region16: #{tpu_custom_call.1} parent=11 // pred_fallthru
          _
        // Predicated region
        $region17: #{tpu_custom_call.1} parent=11 // pred_check
          %p213 = pneg %p85
        $region18: #{tpu_custom_call.1} parent=11 // pred_check_branch
          %215 = sbr.rel (%p213) target = $region20
        $region19: #{tpu_custom_call.1} parent=11 // pred_region
          _
        $region20: #{tpu_custom_call.1} parent=11 // pred_fallthru
          _
        // Predicated region
        $region21: #{tpu_custom_call.1} parent=11 // pred_check
          %p216 = pneg %p106
        $region22: #{tpu_custom_call.1} parent=11 // pred_check_branch
          %218 = sbr.rel (%p216) target = $region24
        $region23: #{tpu_custom_call.1} parent=11 // pred_region
          %s220 = ssub.s32 4096, 4096
          %221 = vsyncadd [#allocation3], %s220
          %s222 = sshll.u32 [#allocation2], 4
          %s223 = int_to_ptr.vmem [resolvable:$true] %s222
          %228 = dma.hbm_to_vmem [thread:$0]  %s3, 4096, %s223, [#allocation3], 128, 128, 8
        $region24: #{tpu_custom_call.1} parent=11 // pred_fallthru
          _
        // Predicated region
        $region25: #{tpu_custom_call.1} parent=11 // pred_check
          %p229 = pneg %p127
        $region26: #{tpu_custom_call.1} parent=11 // pred_check_branch
          %231 = sbr.rel (%p229) target = $region28
        $region27: #{tpu_custom_call.1} parent=11 // pred_region
          _
        $region28: #{tpu_custom_call.1} parent=11 // pred_fallthru
          _
        // Predicated region
        $region29: #{tpu_custom_call.1} parent=11 // pred_check
          %p232 = pneg %p148
        $region30: #{tpu_custom_call.1} parent=11 // pred_check_branch
          %234 = sbr.rel (%p232) target = $region32
        $region31: #{tpu_custom_call.1} parent=11 // pred_region
          _
        $region32: #{tpu_custom_call.1} parent=11 // pred_fallthru
          _
        // Predicated region
        $region33: #{tpu_custom_call.1} parent=11 // pred_check
          %p235 = pneg %p169
        $region34: #{tpu_custom_call.1} parent=11 // pred_check_branch
          %237 = sbr.rel (%p235) target = $region36
        $region35: #{tpu_custom_call.1} parent=11 // pred_region
          _
        $region36: #{tpu_custom_call.1} parent=11 // pred_fallthru
          _
      $region12: #{tpu_custom_call.1} parent=5 // pred_fallthru
        _
      %p238 = scmp.lt.s32.totalorder %s17, 2
      // Predicated region
      $region37: #{tpu_custom_call.1} parent=5 // pred_check
        %p239 = pneg %p238
      $region38: #{tpu_custom_call.1} parent=5 // pred_check_branch
        %241 = sbr.rel (%p239) target = $region40
      $region39: #{tpu_custom_call.1} parent=5 // pred_region
        // Predicated region
        $region41: #{tpu_custom_call.1} parent=39 // pred_check
          %p242 = pneg %p37
        $region42: #{tpu_custom_call.1} parent=39 // pred_check_branch
          %244 = sbr.rel (%p242) target = $region44
        $region43: #{tpu_custom_call.1} parent=39 // pred_region
          %s245 = smul.u32 2, %s17
          %p246 = scmp.lt.s32.totalorder %s245, 3
          %s247 = scalar_select %p246, %s245, 3
          %s248 = smul.addr %s247, 8
          %s249 = scalar_lea.vmem %s0, %s248
          %s250 = smul.u32 2, %s17
        $region44: #{tpu_custom_call.1} parent=39 // pred_fallthru
          _
      $region40: #{tpu_custom_call.1} parent=5 // pred_fallthru
        _
      %p251 = scmp.le.s32.totalorder 1, %s17
      %p252 = scmp.lt.s32.totalorder %s17, 3
      %p253 = pnand %p251, %p252
      %p254 = pneg %p253
      // Predicated region
      $region45: #{tpu_custom_call.1} parent=5 // pred_check
        _
      $region46: #{tpu_custom_call.1} parent=5 // pred_check_branch
        %256 = sbr.rel (%p253) target = $region48
      $region47: #{tpu_custom_call.1} parent=5 // pred_region
        %s257 = ssub.s32 %s17, 1
        // Predicated region
        $region49: #{tpu_custom_call.1} parent=47 // pred_check
          %p258 = pneg %p106
        $region50: #{tpu_custom_call.1} parent=47 // pred_check_branch
          %260 = sbr.rel (%p258) target = $region52
        $region51: #{tpu_custom_call.1} parent=47 // pred_region
          %261 = dma.done [#allocation3], 4096
        $region52: #{tpu_custom_call.1} parent=47 // pred_fallthru
          _
        %s262 = smul.u32 2, %s22
        %p263 = scmp.lt.s32.totalorder %s262, 3
        %s264 = scalar_select %p263, %s262, 3
        %s265 = smul.addr %s264, 8
        %s266 = scalar_lea.vmem %s0, %s265
        %p267 = pneg %p43
        %p268 = pneg %p40
        %p269 = pneg %p64
        %p270 = pneg %p61
        %p271 = pneg %p85
        %p272 = pneg %p82
        %p273 = pneg %p106
        %p274 = pneg %p103
        %p275 = pneg %p127
        %p276 = pneg %p124
        %p277 = pneg %p148
        %p278 = pneg %p145
        %p279 = pneg %p169
        %p280 = pneg %p166
        %p281 = pneg %p195
        %p282 = pneg %p192
        %s283 = sand.u32 %s182, 1
        %s284 = scalar_lea.sflag [#allocation4], %s283
        %s285 = sand.u32 %s182, 1
        %s286 = smul.addr %s285, 16
        %s287 = scalar_lea.vmem [#allocation5], %s286
        %s288 = smul.u32 2, %s22
        %p289 = scmp.lt.s32.totalorder %s288, 3
        %s290 = scalar_select %p289, %s288, 3
        %s291 = smul.addr %s290, 8
        %s292 = scalar_lea.vmem %s0, %s291
        %s293 = smul.u32 2, %s22
        %s294 = smul.u32 2, %s22
        %v296 = vld [vmem:[%s292] sm:$0xff]
        %v297 = vld [vmem:[%s292 + $0x8] sm:$0xff]
        %v298 = vpack.c.bf16 %v297, %v296
        %v299 = vld [vmem:[%s1] sm:$0xff]
        %v300 = vld [vmem:[%s1 + $0x8] sm:$0xff]
        %v301 = vld [vmem:[%s1 + $0x10] sm:$0xff]
        %v302 = vld [vmem:[%s1 + $0x18] sm:$0xff]
        %v303 = vld [vmem:[%s1 + $0x20] sm:$0xff]
        %v304 = vld [vmem:[%s1 + $0x28] sm:$0xff]
        %v305 = vld [vmem:[%s1 + $0x30] sm:$0xff]
        %v306 = vld [vmem:[%s1 + $0x38] sm:$0xff]
        %v307 = vld [vmem:[%s1 + $0x40] sm:$0xff]
        %v308 = vld [vmem:[%s1 + $0x48] sm:$0xff]
        %v309 = vld [vmem:[%s1 + $0x50] sm:$0xff]
        %v310 = vld [vmem:[%s1 + $0x58] sm:$0xff]
        %v311 = vld [vmem:[%s1 + $0x60] sm:$0xff]
        %v312 = vld [vmem:[%s1 + $0x68] sm:$0xff]
        %v313 = vld [vmem:[%s1 + $0x70] sm:$0xff]
        %v314 = vld [vmem:[%s1 + $0x78] sm:$0xff]
        %v315 = vld [vmem:[%s2] sm:$0x3]
        %v317 = vlaneseq
        %v318 = vshrl.u32 %v317, 7
        %v319 = vsub.s32 0, %v318
        %v320 = vrot.slane %v315, %v319
        %v321 = vlaneseq
        %v322 = vshrl.u32 %v321, 7
        %v323 = vsub.s32 1, %v322
        %v324 = vrot.slane %v315, %v323
        %v343 = vunpack.c.l.b16 %v299
        %v344 = vunpack.c.h.b16 %v299
        %v345 = vunpack.c.l.b16 %v300
        %v346 = vunpack.c.h.b16 %v300
        %v347 = vunpack.c.l.b16 %v301
        %v348 = vunpack.c.h.b16 %v301
        %v349 = vunpack.c.l.b16 %v302
        %v350 = vunpack.c.h.b16 %v302
        %v351 = vunpack.c.l.b16 %v303
        %v352 = vunpack.c.h.b16 %v303
        %v353 = vunpack.c.l.b16 %v304
        %v354 = vunpack.c.h.b16 %v304
        %v355 = vunpack.c.l.b16 %v305
        %v356 = vunpack.c.h.b16 %v305
        %v357 = vunpack.c.l.b16 %v306
        %v358 = vunpack.c.h.b16 %v306
        %v359 = vunpack.c.l.b16 %v307
        %v360 = vunpack.c.h.b16 %v307
        %v361 = vunpack.c.l.b16 %v308
        %v362 = vunpack.c.h.b16 %v308
        %v363 = vunpack.c.l.b16 %v309
        %v364 = vunpack.c.h.b16 %v309
        %v365 = vunpack.c.l.b16 %v310
        %v366 = vunpack.c.h.b16 %v310
        %v367 = vunpack.c.l.b16 %v311
        %v368 = vunpack.c.h.b16 %v311
        %v369 = vunpack.c.l.b16 %v312
        %v370 = vunpack.c.h.b16 %v312
        %v371 = vunpack.c.l.b16 %v313
        %v372 = vunpack.c.h.b16 %v313
        %v373 = vunpack.c.l.b16 %v314
        %v374 = vunpack.c.h.b16 %v314
        %v375 = vpack.c.b16 %v345, %v343
        %v376 = vpack.c.b16 %v346, %v344
        %v377 = vpack.c.b16 %v349, %v347
        %v378 = vpack.c.b16 %v350, %v348
        %v379 = vpack.c.b16 %v353, %v351
        %v380 = vpack.c.b16 %v354, %v352
        %v381 = vpack.c.b16 %v357, %v355
        %v382 = vpack.c.b16 %v358, %v356
        %v383 = vpack.c.b16 %v361, %v359
        %v384 = vpack.c.b16 %v362, %v360
        %v385 = vpack.c.b16 %v365, %v363
        %v386 = vpack.c.b16 %v366, %v364
        %v387 = vpack.c.b16 %v369, %v367
        %v388 = vpack.c.b16 %v370, %v368
        %v389 = vpack.c.b16 %v373, %v371
        %v390 = vpack.c.b16 %v374, %v372
        %407 = vmatprep.subr.bf16.mxu0 %v390
        %408 = vmatpush1.bf16.msra.mxu0 %v389
        %409 = vmatprep.subr.bf16.mxu0 %v388
        %410 = vmatpush1.bf16.msra.mxu0 %v387
        %411 = vmatprep.subr.bf16.mxu0 %v386
        %412 = vmatpush1.bf16.msra.mxu0 %v385
        %413 = vmatprep.subr.bf16.mxu0 %v384
        %414 = vmatpush1.bf16.msra.mxu0 %v383
        %415 = vmatprep.subr.bf16.mxu0 %v382
        %416 = vmatpush1.bf16.msra.mxu0 %v381
        %417 = vmatprep.subr.bf16.mxu0 %v380
        %418 = vmatpush1.bf16.msra.mxu0 %v379
        %419 = vmatprep.subr.bf16.mxu0 %v378
        %420 = vmatpush1.bf16.msra.mxu0 %v377
        %421 = vmatprep.subr.bf16.mxu0 %v376
        %422 = vmatpush1.bf16.msra.mxu0 %v375
        %423 = vmatprep.subr.bf16.mxu0 0
        %424 = vmatpush2.bf16.msra.mxu0 0
        %425 = vmatprep.subr.bf16.mxu0 0
        %426 = vmatpush2.bf16.msra.mxu0 0
        %427 = vmatprep.subr.bf16.mxu0 0
        %428 = vmatpush2.bf16.msra.mxu0 0
        %429 = vmatprep.subr.bf16.mxu0 0
        %430 = vmatpush2.bf16.msra.mxu0 0
        %431 = vmatprep.subr.bf16.mxu0 0
        %432 = vmatpush2.bf16.msra.mxu0 0
        %433 = vmatprep.subr.bf16.mxu0 0
        %434 = vmatpush2.bf16.msra.mxu0 0
        %435 = vmatprep.subr.bf16.mxu0 0
        %436 = vmatpush2.bf16.msra.mxu0 0
        %437 = vmatprep.subr.bf16.mxu0 0
        %438 = vmatpush2.bf16.msra.mxu0 0
        %439 = vmatprep.mubr.bf16.mxu0 0
        %440 = vmatmul.mubr.bf16.gmra.mxu0 %v298
        %v441 = vpop.f32.mrf.mxu0
        %v442 = vadd.f32 %v320, %v441
        %v443 = vpop.f32.mrf.mxu0
        %v444 = vadd.f32 %v324, %v443
        %v445 = vpop.f32.mrf.mxu0
        %v446 = vadd.f32 %v320, %v445
        %v447 = vpop.f32.mrf.mxu0
        %v448 = vadd.f32 %v324, %v447
        %449 = vdwg.mxu0
        %v450 = vmax.f32 %v442, 0.0
        %v451 = vmax.f32 %v444, 0.0
        %v452 = vmax.f32 %v446, 0.0
        %v453 = vmax.f32 %v448, 0.0
        %v454 = vpack.c.bf16 %v452, %v450
        %v455 = vpack.c.bf16 %v453, %v451
        %v456 = vld [vmem:[#allocation2] sm:$0xff]
        %v457 = vld [vmem:[#allocation2 + $0x8] sm:$0xff]
        %v458 = vld [vmem:[#allocation2 + $0x10] sm:$0xff]
        %v459 = vld [vmem:[#allocation2 + $0x18] sm:$0xff]
        %v460 = vld [vmem:[#allocation2 + $0x20] sm:$0xff]
        %v461 = vld [vmem:[#allocation2 + $0x28] sm:$0xff]
        %v462 = vld [vmem:[#allocation2 + $0x30] sm:$0xff]
        %v463 = vld [vmem:[#allocation2 + $0x38] sm:$0xff]
        %v464 = vld [vmem:[#allocation2 + $0x40] sm:$0xff]
        %v465 = vld [vmem:[#allocation2 + $0x48] sm:$0xff]
        %v466 = vld [vmem:[#allocation2 + $0x50] sm:$0xff]
        %v467 = vld [vmem:[#allocation2 + $0x58] sm:$0xff]
        %v468 = vld [vmem:[#allocation2 + $0x60] sm:$0xff]
        %v469 = vld [vmem:[#allocation2 + $0x68] sm:$0xff]
        %v470 = vld [vmem:[#allocation2 + $0x70] sm:$0xff]
        %v471 = vld [vmem:[#allocation2 + $0x78] sm:$0xff]
        %v472 = vld [vmem:[#allocation2 + $0x80] sm:$0xff]
        %v473 = vld [vmem:[#allocation2 + $0x88] sm:$0xff]
        %v474 = vld [vmem:[#allocation2 + $0x90] sm:$0xff]
        %v475 = vld [vmem:[#allocation2 + $0x98] sm:$0xff]
        %v476 = vld [vmem:[#allocation2 + $0xa0] sm:$0xff]
        %v477 = vld [vmem:[#allocation2 + $0xa8] sm:$0xff]
        %v478 = vld [vmem:[#allocation2 + $0xb0] sm:$0xff]
        %v479 = vld [vmem:[#allocation2 + $0xb8] sm:$0xff]
        %v480 = vld [vmem:[#allocation2 + $0xc0] sm:$0xff]
        %v481 = vld [vmem:[#allocation2 + $0xc8] sm:$0xff]
        %v482 = vld [vmem:[#allocation2 + $0xd0] sm:$0xff]
        %v483 = vld [vmem:[#allocation2 + $0xd8] sm:$0xff]
        %v484 = vld [vmem:[#allocation2 + $0xe0] sm:$0xff]
        %v485 = vld [vmem:[#allocation2 + $0xe8] sm:$0xff]
        %v486 = vld [vmem:[#allocation2 + $0xf0] sm:$0xff]
        %v487 = vld [vmem:[#allocation2 + $0xf8] sm:$0xff]
        %v488 = vld [vmem:[%s4] sm:$0x3]
        %v490 = vlaneseq
        %v491 = vshrl.u32 %v490, 7
        %v492 = vsub.s32 0, %v491
        %v493 = vrot.slane %v488, %v492
        %v494 = vlaneseq
        %v495 = vshrl.u32 %v494, 7
        %v496 = vsub.s32 1, %v495
        %v497 = vrot.slane %v488, %v496
        %v532 = vunpack.c.l.b16 %v456
        %v533 = vunpack.c.h.b16 %v456
        %v534 = vunpack.c.l.b16 %v457
        %v535 = vunpack.c.h.b16 %v457
        %v536 = vunpack.c.l.b16 %v458
        %v537 = vunpack.c.h.b16 %v458
        %v538 = vunpack.c.l.b16 %v459
        %v539 = vunpack.c.h.b16 %v459
        %v540 = vunpack.c.l.b16 %v460
        %v541 = vunpack.c.h.b16 %v460
        %v542 = vunpack.c.l.b16 %v461
        %v543 = vunpack.c.h.b16 %v461
        %v544 = vunpack.c.l.b16 %v462
        %v545 = vunpack.c.h.b16 %v462
        %v546 = vunpack.c.l.b16 %v463
        %v547 = vunpack.c.h.b16 %v463
        %v548 = vunpack.c.l.b16 %v464
        %v549 = vunpack.c.h.b16 %v464
        %v550 = vunpack.c.l.b16 %v465
        %v551 = vunpack.c.h.b16 %v465
        %v552 = vunpack.c.l.b16 %v466
        %v553 = vunpack.c.h.b16 %v466
        %v554 = vunpack.c.l.b16 %v467
        %v555 = vunpack.c.h.b16 %v467
        %v556 = vunpack.c.l.b16 %v468
        %v557 = vunpack.c.h.b16 %v468
        %v558 = vunpack.c.l.b16 %v469
        %v559 = vunpack.c.h.b16 %v469
        %v560 = vunpack.c.l.b16 %v470
        %v561 = vunpack.c.h.b16 %v470
        %v562 = vunpack.c.l.b16 %v471
        %v563 = vunpack.c.h.b16 %v471
        %v564 = vunpack.c.l.b16 %v472
        %v565 = vunpack.c.h.b16 %v472
        %v566 = vunpack.c.l.b16 %v473
        %v567 = vunpack.c.h.b16 %v473
        %v568 = vunpack.c.l.b16 %v474
        %v569 = vunpack.c.h.b16 %v474
        %v570 = vunpack.c.l.b16 %v475
        %v571 = vunpack.c.h.b16 %v475
        %v572 = vunpack.c.l.b16 %v476
        %v573 = vunpack.c.h.b16 %v476
        %v574 = vunpack.c.l.b16 %v477
        %v575 = vunpack.c.h.b16 %v477
        %v576 = vunpack.c.l.b16 %v478
        %v577 = vunpack.c.h.b16 %v478
        %v578 = vunpack.c.l.b16 %v479
        %v579 = vunpack.c.h.b16 %v479
        %v580 = vunpack.c.l.b16 %v480
        %v581 = vunpack.c.h.b16 %v480
        %v582 = vunpack.c.l.b16 %v481
        %v583 = vunpack.c.h.b16 %v481
        %v584 = vunpack.c.l.b16 %v482
        %v585 = vunpack.c.h.b16 %v482
        %v586 = vunpack.c.l.b16 %v483
        %v587 = vunpack.c.h.b16 %v483
        %v588 = vunpack.c.l.b16 %v484
        %v589 = vunpack.c.h.b16 %v484
        %v590 = vunpack.c.l.b16 %v485
        %v591 = vunpack.c.h.b16 %v485
        %v592 = vunpack.c.l.b16 %v486
        %v593 = vunpack.c.h.b16 %v486
        %v594 = vunpack.c.l.b16 %v487
        %v595 = vunpack.c.h.b16 %v487
        %v596 = vpack.c.b16 %v534, %v532
        %v597 = vpack.c.b16 %v535, %v533
        %v598 = vpack.c.b16 %v538, %v536
        %v599 = vpack.c.b16 %v539, %v537
        %v600 = vpack.c.b16 %v542, %v540
        %v601 = vpack.c.b16 %v543, %v541
        %v602 = vpack.c.b16 %v546, %v544
        %v603 = vpack.c.b16 %v547, %v545
        %v604 = vpack.c.b16 %v550, %v548
        %v605 = vpack.c.b16 %v551, %v549
        %v606 = vpack.c.b16 %v554, %v552
        %v607 = vpack.c.b16 %v555, %v553
        %v608 = vpack.c.b16 %v558, %v556
        %v609 = vpack.c.b16 %v559, %v557
        %v610 = vpack.c.b16 %v562, %v560
        %v611 = vpack.c.b16 %v563, %v561
        %v612 = vpack.c.b16 %v566, %v564
        %v613 = vpack.c.b16 %v567, %v565
        %v614 = vpack.c.b16 %v570, %v568
        %v615 = vpack.c.b16 %v571, %v569
        %v616 = vpack.c.b16 %v574, %v572
        %v617 = vpack.c.b16 %v575, %v573
        %v618 = vpack.c.b16 %v578, %v576
        %v619 = vpack.c.b16 %v579, %v577
        %v620 = vpack.c.b16 %v582, %v580
        %v621 = vpack.c.b16 %v583, %v581
        %v622 = vpack.c.b16 %v586, %v584
        %v623 = vpack.c.b16 %v587, %v585
        %v624 = vpack.c.b16 %v590, %v588
        %v625 = vpack.c.b16 %v591, %v589
        %v626 = vpack.c.b16 %v594, %v592
        %v627 = vpack.c.b16 %v595, %v593
        %660 = vmatprep.subr.bf16.mxu0 %v611
        %661 = vmatpush1.bf16.msra.mxu0 %v610
        %662 = vmatprep.subr.bf16.mxu0 %v609
        %663 = vmatpush1.bf16.msra.mxu0 %v608
        %664 = vmatprep.subr.bf16.mxu0 %v607
        %665 = vmatpush1.bf16.msra.mxu0 %v606
        %666 = vmatprep.subr.bf16.mxu0 %v605
        %667 = vmatpush1.bf16.msra.mxu0 %v604
        %668 = vmatprep.subr.bf16.mxu0 %v603
        %669 = vmatpush1.bf16.msra.mxu0 %v602
        %670 = vmatprep.subr.bf16.mxu0 %v601
        %671 = vmatpush1.bf16.msra.mxu0 %v600
        %672 = vmatprep.subr.bf16.mxu0 %v599
        %673 = vmatpush1.bf16.msra.mxu0 %v598
        %674 = vmatprep.subr.bf16.mxu0 %v597
        %675 = vmatpush1.bf16.msra.mxu0 %v596
        %676 = vmatprep.subr.bf16.mxu0 %v627
        %677 = vmatpush2.bf16.msra.mxu0 %v626
        %678 = vmatprep.subr.bf16.mxu0 %v625
        %679 = vmatpush2.bf16.msra.mxu0 %v624
        %680 = vmatprep.subr.bf16.mxu0 %v623
        %681 = vmatpush2.bf16.msra.mxu0 %v622
        %682 = vmatprep.subr.bf16.mxu0 %v621
        %683 = vmatpush2.bf16.msra.mxu0 %v620
        %684 = vmatprep.subr.bf16.mxu0 %v619
        %685 = vmatpush2.bf16.msra.mxu0 %v618
        %686 = vmatprep.subr.bf16.mxu0 %v617
        %687 = vmatpush2.bf16.msra.mxu0 %v616
        %688 = vmatprep.subr.bf16.mxu0 %v615
        %689 = vmatpush2.bf16.msra.mxu0 %v614
        %690 = vmatprep.subr.bf16.mxu0 %v613
        %691 = vmatpush2.bf16.msra.mxu0 %v612
        %692 = vmatprep.mubr.bf16.mxu0 %v455
        %693 = vmatmul.mubr.bf16.gmra.mxu0 %v454
        %v694 = vpop.f32.mrf.mxu0
        %v695 = vadd.f32 %v493, %v694
        %v696 = vpop.f32.mrf.mxu0
        %v697 = vadd.f32 %v497, %v696
        %v698 = vpop.f32.mrf.mxu0
        %v699 = vadd.f32 %v493, %v698
        %v700 = vpop.f32.mrf.mxu0
        %v701 = vadd.f32 %v497, %v700
        %702 = vdwg.mxu0
        %v703 = vmax.f32 %v695, 0.0
        %v704 = vmax.f32 %v697, 0.0
        %v705 = vmax.f32 %v699, 0.0
        %v706 = vmax.f32 %v701, 0.0
        %v707 = vpack.c.bf16 %v705, %v703
        %v708 = vpack.c.bf16 %v706, %v704
        %v709 = vld [vmem:[%s5] sm:$0xf]
        %v710 = vld [vmem:[%s5 + $0x4] sm:$0xf]
        %v711 = vld [vmem:[%s5 + $0x8] sm:$0xf]
        %v712 = vld [vmem:[%s5 + $0xc] sm:$0xf]
        %v713 = vld [vmem:[%s5 + $0x10] sm:$0xf]
        %v714 = vld [vmem:[%s5 + $0x14] sm:$0xf]
        %v715 = vld [vmem:[%s5 + $0x18] sm:$0xf]
        %v716 = vld [vmem:[%s5 + $0x1c] sm:$0xf]
        %v717 = vld [vmem:[%s5 + $0x20] sm:$0xf]
        %v718 = vld [vmem:[%s5 + $0x24] sm:$0xf]
        %v719 = vld [vmem:[%s5 + $0x28] sm:$0xf]
        %v720 = vld [vmem:[%s5 + $0x2c] sm:$0xf]
        %v721 = vld [vmem:[%s5 + $0x30] sm:$0xf]
        %v722 = vld [vmem:[%s5 + $0x34] sm:$0xf]
        %v723 = vld [vmem:[%s5 + $0x38] sm:$0xf]
        %v724 = vld [vmem:[%s5 + $0x3c] sm:$0xf]
        %v725 = vld [vmem:[%s5 + $0x40] sm:$0xf]
        %v726 = vld [vmem:[%s5 + $0x44] sm:$0xf]
        %v727 = vld [vmem:[%s5 + $0x48] sm:$0xf]
        %v728 = vld [vmem:[%s5 + $0x4c] sm:$0xf]
        %v729 = vld [vmem:[%s5 + $0x50] sm:$0xf]
        %v730 = vld [vmem:[%s5 + $0x54] sm:$0xf]
        %v731 = vld [vmem:[%s5 + $0x58] sm:$0xf]
        %v732 = vld [vmem:[%s5 + $0x5c] sm:$0xf]
        %v733 = vld [vmem:[%s5 + $0x60] sm:$0xf]
        %v734 = vld [vmem:[%s5 + $0x64] sm:$0xf]
        %v735 = vld [vmem:[%s5 + $0x68] sm:$0xf]
        %v736 = vld [vmem:[%s5 + $0x6c] sm:$0xf]
        %v737 = vld [vmem:[%s5 + $0x70] sm:$0xf]
        %v738 = vld [vmem:[%s5 + $0x74] sm:$0xf]
        %v739 = vld [vmem:[%s5 + $0x78] sm:$0xf]
        %v740 = vld [vmem:[%s5 + $0x7c] sm:$0xf]
        %v741 = vld [vmem:[%s6] sm:$0x1]
        %v743 = vlaneseq
        %v744 = vshrl.u32 %v743, 7
        %v745 = vsub.s32 0, %v744
        %v746 = vrot.slane %v741, %v745
        %v780 = vunpack.c.l.b16 %v709
        %v781 = vunpack.c.l.b16 %v710
        %v782 = vunpack.c.l.b16 %v711
        %v783 = vunpack.c.l.b16 %v712
        %v784 = vunpack.c.l.b16 %v713
        %v785 = vunpack.c.l.b16 %v714
        %v786 = vunpack.c.l.b16 %v715
        %v787 = vunpack.c.l.b16 %v716
        %v788 = vunpack.c.l.b16 %v717
        %v789 = vunpack.c.l.b16 %v718
        %v790 = vunpack.c.l.b16 %v719
        %v791 = vunpack.c.l.b16 %v720
        %v792 = vunpack.c.l.b16 %v721
        %v793 = vunpack.c.l.b16 %v722
        %v794 = vunpack.c.l.b16 %v723
        %v795 = vunpack.c.l.b16 %v724
        %v796 = vunpack.c.l.b16 %v725
        %v797 = vunpack.c.l.b16 %v726
        %v798 = vunpack.c.l.b16 %v727
        %v799 = vunpack.c.l.b16 %v728
        %v800 = vunpack.c.l.b16 %v729
        %v801 = vunpack.c.l.b16 %v730
        %v802 = vunpack.c.l.b16 %v731
        %v803 = vunpack.c.l.b16 %v732
        %v804 = vunpack.c.l.b16 %v733
        %v805 = vunpack.c.l.b16 %v734
        %v806 = vunpack.c.l.b16 %v735
        %v807 = vunpack.c.l.b16 %v736
        %v808 = vunpack.c.l.b16 %v737
        %v809 = vunpack.c.l.b16 %v738
        %v810 = vunpack.c.l.b16 %v739
        %v811 = vunpack.c.l.b16 %v740
        %v812 = vpack.c.b16 %v781, %v780
        %v813 = vpack.c.b16 %v783, %v782
        %v814 = vpack.c.b16 %v785, %v784
        %v815 = vpack.c.b16 %v787, %v786
        %v816 = vpack.c.b16 %v789, %v788
        %v817 = vpack.c.b16 %v791, %v790
        %v818 = vpack.c.b16 %v793, %v792
        %v819 = vpack.c.b16 %v795, %v794
        %v820 = vpack.c.b16 %v797, %v796
        %v821 = vpack.c.b16 %v799, %v798
        %v822 = vpack.c.b16 %v801, %v800
        %v823 = vpack.c.b16 %v803, %v802
        %v824 = vpack.c.b16 %v805, %v804
        %v825 = vpack.c.b16 %v807, %v806
        %v826 = vpack.c.b16 %v809, %v808
        %v827 = vpack.c.b16 %v811, %v810
        %844 = vmatprep.subr.bf16.mxu0 0
        %845 = vmatpush1.bf16.msra.mxu0 %v819
        %846 = vmatprep.subr.bf16.mxu0 0
        %847 = vmatpush1.bf16.msra.mxu0 %v818
        %848 = vmatprep.subr.bf16.mxu0 0
        %849 = vmatpush1.bf16.msra.mxu0 %v817
        %850 = vmatprep.subr.bf16.mxu0 0
        %851 = vmatpush1.bf16.msra.mxu0 %v816
        %852 = vmatprep.subr.bf16.mxu0 0
        %853 = vmatpush1.bf16.msra.mxu0 %v815
        %854 = vmatprep.subr.bf16.mxu0 0
        %855 = vmatpush1.bf16.msra.mxu0 %v814
        %856 = vmatprep.subr.bf16.mxu0 0
        %857 = vmatpush1.bf16.msra.mxu0 %v813
        %858 = vmatprep.subr.bf16.mxu0 0
        %859 = vmatpush1.bf16.msra.mxu0 %v812
        %860 = vmatprep.subr.bf16.mxu0 0
        %861 = vmatpush2.bf16.msra.mxu0 %v827
        %862 = vmatprep.subr.bf16.mxu0 0
        %863 = vmatpush2.bf16.msra.mxu0 %v826
        %864 = vmatprep.subr.bf16.mxu0 0
        %865 = vmatpush2.bf16.msra.mxu0 %v825
        %866 = vmatprep.subr.bf16.mxu0 0
        %867 = vmatpush2.bf16.msra.mxu0 %v824
        %868 = vmatprep.subr.bf16.mxu0 0
        %869 = vmatpush2.bf16.msra.mxu0 %v823
        %870 = vmatprep.subr.bf16.mxu0 0
        %871 = vmatpush2.bf16.msra.mxu0 %v822
        %872 = vmatprep.subr.bf16.mxu0 0
        %873 = vmatpush2.bf16.msra.mxu0 %v821
        %874 = vmatprep.subr.bf16.mxu0 0
        %875 = vmatpush2.bf16.msra.mxu0 %v820
        %876 = vmatprep.mubr.bf16.mxu0 %v708
        %877 = vmatmul.mubr.bf16.gmra.mxu0 %v707
        %v878 = vpop.f32.mrf.mxu0
        %v879 = vadd.f32 %v746, %v878
        %v880 = vpop.f32.mrf.mxu0
        %v881 = vpop.f32.mrf.mxu0
        %v882 = vadd.f32 %v746, %v881
        %v883 = vpop.f32.mrf.mxu0
        %884 = vdwg.mxu0
        %v885 = vmax.f32 %v879, 0.0
        %v886 = vmax.f32 %v882, 0.0
        %vm887 = vcmask 523264
        %888 = vst.msk [vmem:[%s287] sm:$0xff] %vm887, %v885
        %889 = vst.msk [vmem:[%s287 + $0x8] sm:$0xff] %vm887, %v886
        %s890 = sand.u32 %s182, 1
        %s891 = scalar_lea.sflag [#allocation4], %s890
        %s892 = sand.u32 %s182, 1
        %s893 = smul.addr %s892, 16
        %s894 = scalar_lea.vmem [#allocation5], %s893
        // Predicated region
        $region53: #{tpu_custom_call.1} parent=47 // pred_check
          %p895 = pneg %p192
        $region54: #{tpu_custom_call.1} parent=47 // pred_check_branch
          %897 = sbr.rel (%p895) target = $region56
        $region55: #{tpu_custom_call.1} parent=47 // pred_region
          %s898 = smul.u32 2, %s22
          %s900 = ssub.s32 256, 256
          %901 = vsyncadd %s891, %s900
          %s902 = smul.addr %s898, 128
          %s903 = scalar_lea.hbm %s7, %s902
          %s904 = sshll.u32 %s894, 4
          %s905 = int_to_ptr.vmem [resolvable:$true] %s904
          %910 = dma.vmem_to_hbm [thread:$0]  %s905, 256, %s903, %s891, 128, 128, 8
        $region56: #{tpu_custom_call.1} parent=47 // pred_fallthru
          _
      $region48: #{tpu_custom_call.1} parent=5 // pred_fallthru
        _
      %p911 = scmp.le.s32.totalorder 2, %s17
      // Predicated region
      $region57: #{tpu_custom_call.1} parent=5 // pred_check
        %p912 = pneg %p911
      $region58: #{tpu_custom_call.1} parent=5 // pred_check_branch
        %914 = sbr.rel (%p912) target = $region60
      $region59: #{tpu_custom_call.1} parent=5 // pred_region
        %s915 = ssub.s32 %s17, 2
        // Predicated region
        $region61: #{tpu_custom_call.1} parent=59 // pred_check
          %p916 = pneg %p198
        $region62: #{tpu_custom_call.1} parent=59 // pred_check_branch
          %918 = sbr.rel (%p916) target = $region64
        $region63: #{tpu_custom_call.1} parent=59 // pred_region
          %s919 = sand.u32 %s183, 1
          %s920 = scalar_lea.sflag [#allocation4], %s919
          %s921 = sand.u32 %s183, 1
          %s922 = smul.addr %s921, 16
          %s923 = scalar_lea.vmem [#allocation5], %s922
          %924 = dma.done %s920, 256
        $region64: #{tpu_custom_call.1} parent=59 // pred_fallthru
          _
      $region60: #{tpu_custom_call.1} parent=5 // pred_fallthru
        _
    $region6: #{tpu_custom_call.1} parent=1 // loop_footer
      %s21 = sadd.s32 1, %s17
    $region7: #{tpu_custom_call.1} parent=1 // loop_footer_branch
      %16 = sbr.rel target = $region3
    $region8: #{tpu_custom_call.1} parent=1 // loop_exit
      _
    %925 = vsyncpa [#allocation3], 1
    %s926 = scalar_lea.sflag [#allocation3], 1
    %927 = vsyncpa %s926, 1
    %928 = vsyncpa [#allocation4], 1
    %s929 = scalar_lea.sflag [#allocation4], 1
    %930 = vsyncpa %s929, 1

</llo_original>
